<compile_context>
chip_gen: v6e
topology: v6e:2x2x1
jax: 0.10.0
libtpu: 0.0.40
codegen_flags: <defaults>
</compile_context>

<pallas_src>
import functools

import jax
import jax.numpy as jnp
from jax.experimental import pallas as pl
from jax.experimental.pallas import tpu as pltpu

_LANE = 128


def _round_up(x, m):
    return (x + m - 1) // m * m


def _cdiv(a, b):
    return -(-a // b)


def _vmem_tile_bytes(rows, cols, dtype):
    """Bytes a (rows, cols) tile of `dtype` actually occupies in VMEM (lane/sublane padded)."""
    itemsize = jnp.dtype(dtype).itemsize
    sub = 32 // itemsize                      # f32 -> 8 sublanes, bf16 -> 16
    return _round_up(max(rows, 1), sub) * _round_up(max(cols, 1), _LANE) * itemsize


def _pick_batch_tile(batch, block_batch):
    """Pick (tile_rows, padded_batch).

    Prefers: (1) a tile that divides the 8-rounded batch (no jnp.pad copy of x),
    (2) >=2 (usually >=4) grid steps for large batches (v7x dual-TC sharding),
    (3) large tiles (~256-512 rows) to amortize per-grid-step overhead.
    """
    align = 8
    batch_a = _round_up(batch, align)
    target = _round_up(min(max(block_batch, align), batch_a), align)
    if batch_a >= 512:
        # Large batch: cap the tile so the grid has multiple steps.
        target = min(target, max(256, _round_up(_cdiv(batch_a, 4), align)))
    # Prefer a tile (not much smaller than target) that divides batch_a exactly.
    lo = max(align, target // 2)
    for cand in range(target, lo - 1, -align):
        if batch_a % cand == 0:
            return cand, batch_a
    return target, _round_up(batch_a, target)


def _rnd_mlp_kernel(x_ref, w1_ref, b1_ref, w2_ref, b2_ref, w3_ref, b3_ref, o_ref):
    # Cast x to the MXU feed dtype in-kernel (no wrapper-side HBM pass over x).
    x = x_ref[...].astype(w1_ref.dtype)
    # Hidden layer 1: matmul (f32 accumulate) + bias/ReLU on the VPU in f32.
    h = jnp.dot(x, w1_ref[...], preferred_element_type=jnp.float32)
    h = jnp.maximum(h + b1_ref[...], 0.0)
    # Hidden layer 2.
    h = jnp.dot(h.astype(w2_ref.dtype), w2_ref[...], preferred_element_type=jnp.float32)
    h = jnp.maximum(h + b2_ref[...], 0.0)
    # Output layer: out_dim stays unpadded (block last dim == full array dim),
    # so HBM writeback is exactly batch*out_dim*4 bytes.
    out = jnp.dot(h.astype(w3_ref.dtype), w3_ref[...], preferred_element_type=jnp.float32)
    o_ref[...] = (out + b3_ref[...]).astype(o_ref.dtype)


@functools.partial(jax.jit, static_argnames=("block_batch",))
def rnd_forward(x, w1, b1, w2, b2, w3, b3, *, block_batch=512):
    """Forward pass. Expects params already processed by prepare_rnd_params."""
    batch, in_dim = x.shape
    h1p = w1.shape[1]
    h2p = w2.shape[1]
    out_dim = w3.shape[1]

    # ---- batch tiling (prefer no padded copy of x) ----
    tb, batch_p = _pick_batch_tile(batch, block_batch)
    if batch_p != batch:
        x = jnp.pad(x, ((0, batch_p - batch), (0, 0)))
    grid = (batch_p // tb,)

    # ---- tight VMEM budget: lane/sublane padding + default 2x buffering ----
    io_bytes = 2 * (_vmem_tile_bytes(tb, in_dim, x.dtype)
                    + _vmem_tile_bytes(tb, out_dim, jnp.float32))
    # Resident operands (constant index map) still get 2 buffers by default.
    # (pl.Buffered(1) would halve this; kept default for lowering robustness.)
    weight_bytes = 2 * sum(_vmem_tile_bytes(a.shape[0], a.shape[1], a.dtype)
                           for a in (w1, b1, w2, b2, w3, b3))
    act_bytes = (_vmem_tile_bytes(tb, in_dim, w1.dtype)
                 + _vmem_tile_bytes(tb, h1p, jnp.float32)
                 + _vmem_tile_bytes(tb, h2p, jnp.float32)
                 + _vmem_tile_bytes(tb, out_dim, jnp.float32))
    total = io_bytes + weight_bytes + act_bytes
    vmem_limit = min(64 << 20, int(1.25 * total) + (4 << 20))

    param_bytes = sum(a.size * jnp.dtype(a.dtype).itemsize
                      for a in (w1, b1, w2, b2, w3, b3))
    cost = pl.CostEstimate(
        flops=2 * batch_p * (in_dim * h1p + h1p * h2p + h2p * out_dim),
        transcendentals=0,
        bytes_accessed=int(x.size * jnp.dtype(x.dtype).itemsize
                           + param_bytes + batch_p * out_dim * 4),
    )

    def resident(arr):  # weights / biases: VMEM-resident, never re-fetched
        return pl.BlockSpec(arr.shape, lambda i: (0, 0))

    out = pl.pallas_call(
        _rnd_mlp_kernel,
        out_shape=jax.ShapeDtypeStruct((batch_p, out_dim), jnp.float32),
        grid=grid,
        in_specs=[
            pl.BlockSpec((tb, in_dim), lambda i: (i, 0)),   # x: tiled along batch
            resident(w1), resident(b1),
            resident(w2), resident(b2),
            resident(w3), resident(b3),
        ],
        out_specs=pl.BlockSpec((tb, out_dim), lambda i: (i, 0)),
        compiler_params=pltpu.CompilerParams(
            dimension_semantics=("parallel",),              # shards batch tiles across TCs (v7x)
            vmem_limit_bytes=vmem_limit,
        ),
        cost_estimate=cost,
    )(x, w1, b1, w2, b2, w3, b3)

    return out[:batch]


def prepare_rnd_params(params, *, matmul_dtype=jnp.bfloat16):
    """One-time parameter preprocessing, done OUTSIDE the jitted forward.

    Zero-pads the hidden dims up to multiples of 128 lanes (inert through
    ReLU -> results unchanged) and casts weights to the MXU feed dtype
    (bf16 fast path, or jnp.float32 for exact PyTorch-Linear parity).
    Biases stay float32.
    """
    w1, b1, w2, b2, w3, b3 = params
    h1, h2 = w1.shape[1], w2.shape[1]
    h1p, h2p = _round_up(h1, _LANE), _round_up(h2, _LANE)
    w1 = jnp.pad(w1, ((0, 0), (0, h1p - h1)))
    b1 = jnp.pad(b1, ((0, 0), (0, h1p - h1)))
    w2 = jnp.pad(w2, ((0, h1p - h1), (0, h2p - h2)))
    b2 = jnp.pad(b2, ((0, 0), (0, h2p - h2)))
    w3 = jnp.pad(w3, ((0, h2p - h2), (0, 0)))
    return (w1.astype(matmul_dtype), b1.astype(jnp.float32),
            w2.astype(matmul_dtype), b2.astype(jnp.float32),
            w3.astype(matmul_dtype), b3.astype(jnp.float32))


def init_rnd_params(key, input_dimension, output_dimension, hidden_dimension=128,
                    n_layers=2):
    """PyTorch-nn.Linear-style init (uniform +-1/sqrt(fan_in)).

    Weights stored as (in_features, out_features); biases as (1, out_features).
    """
    assert n_layers == 2, "kernel is specialized to the default n_layers=2"
    dims = [input_dimension] + [hidden_dimension] * n_layers + [output_dimension]
    params = []
    for i in range(len(dims) - 1):
        fan_in, fan_out = dims[i], dims[i + 1]
        key, kw, kb = jax.random.split(key, 3)
        bound = 1.0 / (fan_in ** 0.5)
        w = jax.random.uniform(kw, (fan_in, fan_out), jnp.float32, -bound, bound)
        b = jax.random.uniform(kb, (1, fan_out), jnp.float32, -bound, bound)
        params.extend([w, b])
    return tuple(params)


def rnd_reference(x, w1, b1, w2, b2, w3, b3, *, matmul_dtype=jnp.float32):
    prec = "highest" if matmul_dtype == jnp.float32 else None
    def mm(a, w):
        return jnp.dot(a.astype(matmul_dtype), w.astype(matmul_dtype),
                       preferred_element_type=jnp.float32, precision=prec)
    h = jnp.maximum(mm(x, w1) + b1, 0.0)
    h = jnp.maximum(mm(h, w2) + b2, 0.0)
    return mm(h, w3) + b3


if __name__ == "__main__":
    # Small shapes consistent with the module: obs dim 16, RND vector dim 8,
    # hidden 32 (exercises the hidden->128 lane-padding path), n_layers=2.
    batch = 64
    input_dimension = 16
    output_dimension = 8
    hidden_dimension = 32

    key = jax.random.PRNGKey(0)
    key, kx = jax.random.split(key)
    x = jax.random.normal(kx, (batch, input_dimension), dtype=jnp.float32)

    raw_params = init_rnd_params(key, input_dimension, output_dimension,
                                 hidden_dimension=hidden_dimension, n_layers=2)

    # --- default bf16-MXU path ---
    params_bf16 = prepare_rnd_params(raw_params, matmul_dtype=jnp.bfloat16)
    out = rnd_forward(x, *params_bf16)
    jax.block_until_ready(out)
    assert out.shape == (batch, output_dimension)

    ref_bf16 = rnd_reference(x, *raw_params, matmul_dtype=jnp.bfloat16)
    assert jnp.allclose(out, ref_bf16, atol=1e-3, rtol=1e-3), "mismatch vs bf16 reference"
    ref_f32 = rnd_reference(x, *raw_params, matmul_dtype=jnp.float32)
    assert jnp.allclose(out, ref_f32, atol=5e-2, rtol=5e-2), "mismatch vs f32 reference"

    # --- f32-parity path (PyTorch Linear semantics: f32 MXU feeds) ---
    params_f32 = prepare_rnd_params(raw_params, matmul_dtype=jnp.float32)
    out_f32 = rnd_forward(x, *params_f32)
    jax.block_until_ready(out_f32)
    assert jnp.allclose(out_f32, ref_f32, atol=5e-2, rtol=5e-2), "mismatch (f32 path)"

    # --- ragged larger batch: multi-step grid, divisor tile (no x padding) ---
    xb = jax.random.normal(jax.random.PRNGKey(1), (1000, input_dimension), jnp.float32)
    out_b = rnd_forward(xb, *params_bf16, block_batch=256)
    jax.block_until_ready(out_b)
    ref_b = rnd_reference(xb, *raw_params, matmul_dtype=jnp.bfloat16)
    assert out_b.shape == (1000, output_dimension)
    assert jnp.allclose(out_b, ref_b, atol=1e-3, rtol=1e-3), "mismatch (large batch)"

    print("KERNEL_OK")
</pallas_src>

<mosaic_0001>
module attributes {stable_mosaic.version = 11 : i64} {
  func.func @_rnd_mlp_kernel(%arg0: i32, %arg1: memref<64x16xf32, #tpu.memory_space<vmem>>, %arg2: memref<16x128xbf16, #tpu.memory_space<vmem>>, %arg3: memref<1x128xf32, #tpu.memory_space<vmem>>, %arg4: memref<128x128xbf16, #tpu.memory_space<vmem>>, %arg5: memref<1x128xf32, #tpu.memory_space<vmem>>, %arg6: memref<128x8xbf16, #tpu.memory_space<vmem>>, %arg7: memref<1x8xf32, #tpu.memory_space<vmem>>, %arg8: memref<64x8xf32, #tpu.memory_space<vmem>>) attributes {dimension_semantics = [#tpu.dimension_semantics<parallel>], iteration_bounds = array<i64: 1>, scalar_prefetch = 0 : i64, scratch_operands = 0 : i64, tpu.core_type = #tpu.core_type<tc>, window_params = [{transform_indices = @transform_0, window_bounds = array<i64: 64, 16>}, {pipeline_mode = #tpu.pipeline_mode<synchronous>, transform_indices = @transform_1, window_bounds = array<i64: 16, 128>}, {pipeline_mode = #tpu.pipeline_mode<synchronous>, transform_indices = @transform_2, window_bounds = array<i64: 1, 128>}, {pipeline_mode = #tpu.pipeline_mode<synchronous>, transform_indices = @transform_3, window_bounds = array<i64: 128, 128>}, {pipeline_mode = #tpu.pipeline_mode<synchronous>, transform_indices = @transform_4, window_bounds = array<i64: 1, 128>}, {pipeline_mode = #tpu.pipeline_mode<synchronous>, transform_indices = @transform_5, window_bounds = array<i64: 128, 8>}, {pipeline_mode = #tpu.pipeline_mode<synchronous>, transform_indices = @transform_6, window_bounds = array<i64: 1, 8>}, {transform_indices = @transform_7, window_bounds = array<i64: 64, 8>}]} {
    %c0 = arith.constant 0 : index
    %c0_0 = arith.constant 0 : index
    %0 = vector.load %arg1[%c0, %c0_0] : memref<64x16xf32, #tpu.memory_space<vmem>>, vector<64x16xf32>
    %1 = arith.truncf %0 : vector<64x16xf32> to vector<64x16xbf16>
    %c0_1 = arith.constant 0 : index
    %c0_2 = arith.constant 0 : index
    %2 = vector.load %arg2[%c0_1, %c0_2] : memref<16x128xbf16, #tpu.memory_space<vmem>>, vector<16x128xbf16>
    %cst = arith.constant dense<0.000000e+00> : vector<64x128xf32>
    %3 = tpu.matmul %1, %2, %cst {dimension_numbers = #tpu.dot_dimension_numbers<[1], [0], [0], [1], [0, 0, 1, 1], [], []>} : vector<64x16xbf16>, vector<16x128xbf16>, vector<64x128xf32> -> vector<64x128xf32>
    %c0_3 = arith.constant 0 : index
    %c0_4 = arith.constant 0 : index
    %4 = vector.load %arg3[%c0_3, %c0_4] : memref<1x128xf32, #tpu.memory_space<vmem>>, vector<1x128xf32>
    %5 = vector.broadcast %4 : vector<1x128xf32> to vector<64x128xf32>
    %6 = arith.addf %3, %5 : vector<64x128xf32>
    %cst_5 = arith.constant 0.000000e+00 : f32
    %7 = vector.broadcast %cst_5 : f32 to vector<64x128xf32>
    %8 = arith.maximumf %6, %7 : vector<64x128xf32>
    %9 = arith.truncf %8 : vector<64x128xf32> to vector<64x128xbf16>
    %c0_6 = arith.constant 0 : index
    %c0_7 = arith.constant 0 : index
    %10 = vector.load %arg4[%c0_6, %c0_7] : memref<128x128xbf16, #tpu.memory_space<vmem>>, vector<128x128xbf16>
    %cst_8 = arith.constant dense<0.000000e+00> : vector<64x128xf32>
    %11 = tpu.matmul %9, %10, %cst_8 {dimension_numbers = #tpu.dot_dimension_numbers<[1], [0], [0], [1], [0, 0, 1, 1], [], []>} : vector<64x128xbf16>, vector<128x128xbf16>, vector<64x128xf32> -> vector<64x128xf32>
    %c0_9 = arith.constant 0 : index
    %c0_10 = arith.constant 0 : index
    %12 = vector.load %arg5[%c0_9, %c0_10] : memref<1x128xf32, #tpu.memory_space<vmem>>, vector<1x128xf32>
    %13 = vector.broadcast %12 : vector<1x128xf32> to vector<64x128xf32>
    %14 = arith.addf %11, %13 : vector<64x128xf32>
    %cst_11 = arith.constant 0.000000e+00 : f32
    %15 = vector.broadcast %cst_11 : f32 to vector<64x128xf32>
    %16 = arith.maximumf %14, %15 : vector<64x128xf32>
    %17 = arith.truncf %16 : vector<64x128xf32> to vector<64x128xbf16>
    %c0_12 = arith.constant 0 : index
    %c0_13 = arith.constant 0 : index
    %18 = vector.load %arg6[%c0_12, %c0_13] : memref<128x8xbf16, #tpu.memory_space<vmem>>, vector<128x8xbf16>
    %cst_14 = arith.constant dense<0.000000e+00> : vector<64x8xf32>
    %19 = tpu.matmul %17, %18, %cst_14 {dimension_numbers = #tpu.dot_dimension_numbers<[1], [0], [0], [1], [0, 0, 1, 1], [], []>} : vector<64x128xbf16>, vector<128x8xbf16>, vector<64x8xf32> -> vector<64x8xf32>
    %c0_15 = arith.constant 0 : index
    %c0_16 = arith.constant 0 : index
    %20 = vector.load %arg7[%c0_15, %c0_16] : memref<1x8xf32, #tpu.memory_space<vmem>>, vector<1x8xf32>
    %21 = vector.broadcast %20 : vector<1x8xf32> to vector<64x8xf32>
    %22 = arith.addf %19, %21 : vector<64x8xf32>
    %c0_17 = arith.constant 0 : index
    %c0_18 = arith.constant 0 : index
    %23 = vector.load %arg8[%c0_17, %c0_18] : memref<64x8xf32, #tpu.memory_space<vmem>>, vector<64x8xf32>
    tpu.vector_store %arg8[%c0_17, %c0_18], %22 {strides = array<i32>} : memref<64x8xf32, #tpu.memory_space<vmem>>, vector<64x8xf32>,
    return
  }
  func.func @transform_0(%arg0: i32) -> (i32, i32) {
    %c0_i32 = arith.constant 0 : i32
    %c0_i32_0 = arith.constant 0 : i32
    return %arg0, %c0_i32 : i32, i32
  }
  func.func @transform_1(%arg0: i32) -> (i32, i32) {
    %c0_i32 = arith.constant 0 : i32
    %c0_i32_0 = arith.constant 0 : i32
    %c0_i32_1 = arith.constant 0 : i32
    return %c0_i32, %c0_i32_0 : i32, i32
  }
  func.func @transform_2(%arg0: i32) -> (i32, i32) {
    %c0_i32 = arith.constant 0 : i32
    %c0_i32_0 = arith.constant 0 : i32
    %c0_i32_1 = arith.constant 0 : i32
    return %c0_i32, %c0_i32_0 : i32, i32
  }
  func.func @transform_3(%arg0: i32) -> (i32, i32) {
    %c0_i32 = arith.constant 0 : i32
    %c0_i32_0 = arith.constant 0 : i32
    %c0_i32_1 = arith.constant 0 : i32
    return %c0_i32, %c0_i32_0 : i32, i32
  }
  func.func @transform_4(%arg0: i32) -> (i32, i32) {
    %c0_i32 = arith.constant 0 : i32
    %c0_i32_0 = arith.constant 0 : i32
    %c0_i32_1 = arith.constant 0 : i32
    return %c0_i32, %c0_i32_0 : i32, i32
  }
  func.func @transform_5(%arg0: i32) -> (i32, i32) {
    %c0_i32 = arith.constant 0 : i32
    %c0_i32_0 = arith.constant 0 : i32
    %c0_i32_1 = arith.constant 0 : i32
    return %c0_i32, %c0_i32_0 : i32, i32
  }
  func.func @transform_6(%arg0: i32) -> (i32, i32) {
    %c0_i32 = arith.constant 0 : i32
    %c0_i32_0 = arith.constant 0 : i32
    %c0_i32_1 = arith.constant 0 : i32
    return %c0_i32, %c0_i32_0 : i32, i32
  }
  func.func @transform_7(%arg0: i32) -> (i32, i32) {
    %c0_i32 = arith.constant 0 : i32
    %c0_i32_0 = arith.constant 0 : i32
    return %arg0, %c0_i32 : i32, i32
  }
}

</mosaic_0001>

<llo_original>
// kernel: rnd_forward.1
$region0: #{rnd_forward.1}
  #allocation0 [shape = 'u32[]', space=smem, size = 0x4, offset = 0x4, fixed_abs, tag = 'smem constant byte address 0x4 - core index']
  #allocation1 [shape = 'u32[144,128]{1,0:T(1,128)}', space=vmem, size = 0x12000, scoped, tag = 'internal scratch']
  %s0 = inlined_call_operand.vmem [shape: f32[64,16], index: 0, kind: input, shape index: {}]
  %s1 = inlined_call_operand.vmem [shape: bf16[16,128], index: 1, kind: input, shape index: {}]
  %s2 = inlined_call_operand.vmem [shape: f32[1,128], index: 2, kind: input, shape index: {}]
  %s3 = inlined_call_operand.vmem [shape: bf16[128,128], index: 3, kind: input, shape index: {}]
  %s4 = inlined_call_operand.vmem [shape: f32[1,128], index: 4, kind: input, shape index: {}]
  %s5 = inlined_call_operand.vmem [shape: bf16[128,8], index: 5, kind: input, shape index: {}]
  %s6 = inlined_call_operand.vmem [shape: f32[1,8], index: 6, kind: input, shape index: {}]
  %s7 = inlined_call_operand.vmem [shape: f32[64,8], index: 7, kind: output, shape index: {}]
  %s8 = sld [smem:[#allocation0]]
  $region38: #{rnd_forward.1} parent=0
    _
  %s10 = ssub.s32 1, %s8
  %s11 = scalar_select 0, %s10, %s8
  // Predicated region
  $region2: #{rnd_forward.1} parent=0 // pred_check
    _
  $region3: #{rnd_forward.1} parent=0 // pred_check_branch
    %13 = sbr.rel (0) target = $region5
  $region4: #{rnd_forward.1} parent=0 // pred_region
    _
  $region5: #{rnd_forward.1} parent=0 // pred_fallthru
    _
  // Predicated region
  $region6: #{rnd_forward.1} parent=0 // pred_check
    _
  $region7: #{rnd_forward.1} parent=0 // pred_check_branch
    %15 = sbr.rel (0) target = $region9
  $region8: #{rnd_forward.1} parent=0 // pred_region
    _
  $region9: #{rnd_forward.1} parent=0 // pred_fallthru
    _
  // Predicated region
  $region10: #{rnd_forward.1} parent=0 // pred_check
    _
  $region11: #{rnd_forward.1} parent=0 // pred_check_branch
    %17 = sbr.rel (0) target = $region13
  $region12: #{rnd_forward.1} parent=0 // pred_region
    _
  $region13: #{rnd_forward.1} parent=0 // pred_fallthru
    _
  // Predicated region
  $region14: #{rnd_forward.1} parent=0 // pred_check
    _
  $region15: #{rnd_forward.1} parent=0 // pred_check_branch
    %19 = sbr.rel (0) target = $region17
  $region16: #{rnd_forward.1} parent=0 // pred_region
    _
  $region17: #{rnd_forward.1} parent=0 // pred_fallthru
    _
  // Predicated region
  $region18: #{rnd_forward.1} parent=0 // pred_check
    _
  $region19: #{rnd_forward.1} parent=0 // pred_check_branch
    %21 = sbr.rel (0) target = $region21
  $region20: #{rnd_forward.1} parent=0 // pred_region
    _
  $region21: #{rnd_forward.1} parent=0 // pred_fallthru
    _
  // Predicated region
  $region22: #{rnd_forward.1} parent=0 // pred_check
    _
  $region23: #{rnd_forward.1} parent=0 // pred_check_branch
    %23 = sbr.rel (0) target = $region25
  $region24: #{rnd_forward.1} parent=0 // pred_region
    _
  $region25: #{rnd_forward.1} parent=0 // pred_fallthru
    _
  // Predicated region
  $region26: #{rnd_forward.1} parent=0 // pred_check
    _
  $region27: #{rnd_forward.1} parent=0 // pred_check_branch
    %25 = sbr.rel (0) target = $region29
  $region28: #{rnd_forward.1} parent=0 // pred_region
    _
  $region29: #{rnd_forward.1} parent=0 // pred_fallthru
    _
  %v27 = vld [vmem:[%s0] sm:$0xff]
  %v28 = vld [vmem:[%s0 + $0x8] sm:$0xff]
  %v29 = vld [vmem:[%s0 + $0x10] sm:$0xff]
  %v30 = vld [vmem:[%s0 + $0x18] sm:$0xff]
  %v31 = vld [vmem:[%s0 + $0x20] sm:$0xff]
  %v32 = vld [vmem:[%s0 + $0x28] sm:$0xff]
  %v33 = vld [vmem:[%s0 + $0x30] sm:$0xff]
  %v34 = vld [vmem:[%s0 + $0x38] sm:$0xff]
  %v35 = vpack.c.bf16 %v28, %v27
  %v36 = vpack.c.bf16 %v30, %v29
  %v37 = vpack.c.bf16 %v32, %v31
  %v38 = vpack.c.bf16 %v34, %v33
  %v39 = vld [vmem:[%s1] sm:$0xf]
  %v40 = vld [vmem:[%s1 + $0x4] sm:$0xf]
  %v41 = vld [vmem:[%s2] sm:$0x1]
  %v43 = vlaneseq
  %v44 = vshrl.u32 %v43, 7
  %v45 = vsub.s32 0, %v44
  %v46 = vrot.slane %v41, %v45
  %v50 = vunpack.c.l.b16 %v39
  %v51 = vunpack.c.l.b16 %v40
  %v52 = vpack.c.b16 %v51, %v50
  %vm54 = vcmask 130048
  %v56 = vsel %vm54, %v35, 0
  %v59 = vsel %vm54, %v36, 0
  %v62 = vsel %vm54, %v37, 0
  %v65 = vsel %vm54, %v38, 0
  %67 = vmatprep.subr.bf16.mxu0 0
  %68 = vmatpush1.bf16.msra.mxu0 0
  %69 = vmatprep.subr.bf16.mxu0 0
  %70 = vmatpush1.bf16.msra.mxu0 0
  %71 = vmatprep.subr.bf16.mxu0 0
  %72 = vmatpush1.bf16.msra.mxu0 0
  %73 = vmatprep.subr.bf16.mxu0 0
  %74 = vmatpush1.bf16.msra.mxu0 0
  %75 = vmatprep.subr.bf16.mxu0 0
  %76 = vmatpush1.bf16.msra.mxu0 0
  %77 = vmatprep.subr.bf16.mxu0 0
  %78 = vmatpush1.bf16.msra.mxu0 0
  %79 = vmatprep.subr.bf16.mxu0 0
  %80 = vmatpush1.bf16.msra.mxu0 0
  %81 = vmatprep.subr.bf16.mxu0 0
  %82 = vmatpush1.bf16.msra.mxu0 %v52
  %83 = vmatprep.subr.bf16.mxu0 0
  %84 = vmatpush2.bf16.msra.mxu0 0
  %85 = vmatprep.subr.bf16.mxu0 0
  %86 = vmatpush2.bf16.msra.mxu0 0
  %87 = vmatprep.subr.bf16.mxu0 0
  %88 = vmatpush2.bf16.msra.mxu0 0
  %89 = vmatprep.subr.bf16.mxu0 0
  %90 = vmatpush2.bf16.msra.mxu0 0
  %91 = vmatprep.subr.bf16.mxu0 0
  %92 = vmatpush2.bf16.msra.mxu0 0
  %93 = vmatprep.subr.bf16.mxu0 0
  %94 = vmatpush2.bf16.msra.mxu0 0
  %95 = vmatprep.subr.bf16.mxu0 0
  %96 = vmatpush2.bf16.msra.mxu0 0
  %97 = vmatprep.subr.bf16.mxu0 0
  %98 = vmatpush2.bf16.msra.mxu0 0
  %99 = vmatprep.mubr.bf16.mxu0 0
  %100 = vmatmul.mubr.bf16.gmra.mxu0 %v56
  %v101 = vpop.f32.mrf.mxu0
  %v102 = vadd.f32 %v46, %v101
  %v103 = vpop.f32.mrf.mxu0
  %v104 = vpop.f32.mrf.mxu0
  %v105 = vadd.f32 %v46, %v104
  %v106 = vpop.f32.mrf.mxu0
  %107 = vmatprep.mubr.bf16.mxu0 0
  %108 = vmatmul.mubr.bf16.gmra.mxu0 %v59
  %v109 = vpop.f32.mrf.mxu0
  %v110 = vadd.f32 %v46, %v109
  %v111 = vpop.f32.mrf.mxu0
  %v112 = vpop.f32.mrf.mxu0
  %v113 = vadd.f32 %v46, %v112
  %v114 = vpop.f32.mrf.mxu0
  %115 = vmatprep.mubr.bf16.mxu0 0
  %116 = vmatmul.mubr.bf16.gmra.mxu0 %v62
  %v117 = vpop.f32.mrf.mxu0
  %v118 = vadd.f32 %v46, %v117
  %v119 = vpop.f32.mrf.mxu0
  %v120 = vpop.f32.mrf.mxu0
  %v121 = vadd.f32 %v46, %v120
  %v122 = vpop.f32.mrf.mxu0
  %123 = vmatprep.mubr.bf16.mxu0 0
  %124 = vmatmul.mubr.bf16.gmra.mxu0 %v65
  %v125 = vpop.f32.mrf.mxu0
  %v126 = vadd.f32 %v46, %v125
  %v127 = vpop.f32.mrf.mxu0
  %v128 = vpop.f32.mrf.mxu0
  %v129 = vadd.f32 %v46, %v128
  %v130 = vpop.f32.mrf.mxu0
  %131 = vdwg.mxu0
  %v132 = vmax.f32 %v102, 0.0
  %v133 = vmax.f32 %v105, 0.0
  %v134 = vmax.f32 %v110, 0.0
  %v135 = vmax.f32 %v113, 0.0
  %v136 = vmax.f32 %v118, 0.0
  %v137 = vmax.f32 %v121, 0.0
  %v138 = vmax.f32 %v126, 0.0
  %v139 = vmax.f32 %v129, 0.0
  %v140 = vpack.c.bf16 %v133, %v132
  %v141 = vpack.c.bf16 %v135, %v134
  %v142 = vpack.c.bf16 %v137, %v136
  %v143 = vpack.c.bf16 %v139, %v138
  %v144 = vld [vmem:[%s3] sm:$0xf]
  %v145 = vld [vmem:[%s3 + $0x4] sm:$0xf]
  %v146 = vld [vmem:[%s3 + $0x8] sm:$0xf]
  %v147 = vld [vmem:[%s3 + $0xc] sm:$0xf]
  %v148 = vld [vmem:[%s3 + $0x10] sm:$0xf]
  %v149 = vld [vmem:[%s3 + $0x14] sm:$0xf]
  %v150 = vld [vmem:[%s3 + $0x18] sm:$0xf]
  %v151 = vld [vmem:[%s3 + $0x1c] sm:$0xf]
  %v152 = vld [vmem:[%s3 + $0x20] sm:$0xf]
  %v153 = vld [vmem:[%s3 + $0x24] sm:$0xf]
  %v154 = vld [vmem:[%s3 + $0x28] sm:$0xf]
  %v155 = vld [vmem:[%s3 + $0x2c] sm:$0xf]
  %v156 = vld [vmem:[%s3 + $0x30] sm:$0xf]
  %v157 = vld [vmem:[%s3 + $0x34] sm:$0xf]
  %v158 = vld [vmem:[%s3 + $0x38] sm:$0xf]
  %v159 = vld [vmem:[%s3 + $0x3c] sm:$0xf]
  %v160 = vld [vmem:[%s4] sm:$0x1]
  %v162 = vlaneseq
  %v163 = vshrl.u32 %v162, 7
  %v164 = vsub.s32 0, %v163
  %v165 = vrot.slane %v160, %v164
  %v183 = vunpack.c.l.b16 %v144
  %v184 = vunpack.c.l.b16 %v145
  %v185 = vunpack.c.l.b16 %v146
  %v186 = vunpack.c.l.b16 %v147
  %v187 = vunpack.c.l.b16 %v148
  %v188 = vunpack.c.l.b16 %v149
  %v189 = vunpack.c.l.b16 %v150
  %v190 = vunpack.c.l.b16 %v151
  %v191 = vunpack.c.l.b16 %v152
  %v192 = vunpack.c.l.b16 %v153
  %v193 = vunpack.c.l.b16 %v154
  %v194 = vunpack.c.l.b16 %v155
  %v195 = vunpack.c.l.b16 %v156
  %v196 = vunpack.c.l.b16 %v157
  %v197 = vunpack.c.l.b16 %v158
  %v198 = vunpack.c.l.b16 %v159
  %v199 = vpack.c.b16 %v184, %v183
  %v200 = vpack.c.b16 %v186, %v185
  %v201 = vpack.c.b16 %v188, %v187
  %v202 = vpack.c.b16 %v190, %v189
  %v203 = vpack.c.b16 %v192, %v191
  %v204 = vpack.c.b16 %v194, %v193
  %v205 = vpack.c.b16 %v196, %v195
  %v206 = vpack.c.b16 %v198, %v197
  %215 = vmatprep.subr.bf16.mxu0 0
  %216 = vmatpush1.bf16.msra.mxu0 %v206
  %217 = vmatprep.subr.bf16.mxu0 0
  %218 = vmatpush1.bf16.msra.mxu0 %v205
  %219 = vmatprep.subr.bf16.mxu0 0
  %220 = vmatpush1.bf16.msra.mxu0 %v204
  %221 = vmatprep.subr.bf16.mxu0 0
  %222 = vmatpush1.bf16.msra.mxu0 %v203
  %223 = vmatprep.subr.bf16.mxu0 0
  %224 = vmatpush1.bf16.msra.mxu0 %v202
  %225 = vmatprep.subr.bf16.mxu0 0
  %226 = vmatpush1.bf16.msra.mxu0 %v201
  %227 = vmatprep.subr.bf16.mxu0 0
  %228 = vmatpush1.bf16.msra.mxu0 %v200
  %229 = vmatprep.subr.bf16.mxu0 0
  %230 = vmatpush1.bf16.msra.mxu0 %v199
  %231 = vmatprep.subr.bf16.mxu0 0
  %232 = vmatpush2.bf16.msra.mxu0 0
  %233 = vmatprep.subr.bf16.mxu0 0
  %234 = vmatpush2.bf16.msra.mxu0 0
  %235 = vmatprep.subr.bf16.mxu0 0
  %236 = vmatpush2.bf16.msra.mxu0 0
  %237 = vmatprep.subr.bf16.mxu0 0
  %238 = vmatpush2.bf16.msra.mxu0 0
  %239 = vmatprep.subr.bf16.mxu0 0
  %240 = vmatpush2.bf16.msra.mxu0 0
  %241 = vmatprep.subr.bf16.mxu0 0
  %242 = vmatpush2.bf16.msra.mxu0 0
  %243 = vmatprep.subr.bf16.mxu0 0
  %244 = vmatpush2.bf16.msra.mxu0 0
  %245 = vmatprep.subr.bf16.mxu0 0
  %246 = vmatpush2.bf16.msra.mxu0 0
  %247 = vmatprep.mubr.bf16.mxu0 0
  %248 = vmatmul.mubr.bf16.gmra.mxu0 %v140
  %v249 = vpop.f32.mrf.mxu0
  %v250 = vadd.f32 %v165, %v249
  %v251 = vpop.f32.mrf.mxu0
  %v252 = vpop.f32.mrf.mxu0
  %v253 = vadd.f32 %v165, %v252
  %v254 = vpop.f32.mrf.mxu0
  %255 = vmatprep.mubr.bf16.mxu0 0
  %256 = vmatmul.mubr.bf16.gmra.mxu0 %v141
  %v257 = vpop.f32.mrf.mxu0
  %v258 = vadd.f32 %v165, %v257
  %v259 = vpop.f32.mrf.mxu0
  %v260 = vpop.f32.mrf.mxu0
  %v261 = vadd.f32 %v165, %v260
  %v262 = vpop.f32.mrf.mxu0
  %263 = vmatprep.mubr.bf16.mxu0 0
  %264 = vmatmul.mubr.bf16.gmra.mxu0 %v142
  %v265 = vpop.f32.mrf.mxu0
  %v266 = vadd.f32 %v165, %v265
  %v267 = vpop.f32.mrf.mxu0
  %v268 = vpop.f32.mrf.mxu0
  %v269 = vadd.f32 %v165, %v268
  %v270 = vpop.f32.mrf.mxu0
  %271 = vmatprep.mubr.bf16.mxu0 0
  %272 = vmatmul.mubr.bf16.gmra.mxu0 %v143
  %v273 = vpop.f32.mrf.mxu0
  %v274 = vadd.f32 %v165, %v273
  %v275 = vpop.f32.mrf.mxu0
  %v276 = vpop.f32.mrf.mxu0
  %v277 = vadd.f32 %v165, %v276
  %v278 = vpop.f32.mrf.mxu0
  %279 = vdwg.mxu0
  %v280 = vmax.f32 %v250, 0.0
  %v281 = vmax.f32 %v253, 0.0
  %v282 = vmax.f32 %v258, 0.0
  %v283 = vmax.f32 %v261, 0.0
  %v284 = vmax.f32 %v266, 0.0
  %v285 = vmax.f32 %v269, 0.0
  %v286 = vmax.f32 %v274, 0.0
  %v287 = vmax.f32 %v277, 0.0
  %v288 = vpack.c.bf16 %v281, %v280
  %v289 = vpack.c.bf16 %v283, %v282
  %v290 = vpack.c.bf16 %v285, %v284
  %v291 = vpack.c.bf16 %v287, %v286
  %v292 = vld [vmem:[%s5] sm:$0xf]
  %v293 = vld [vmem:[%s5 + $0x4] sm:$0xf]
  %v294 = vld [vmem:[%s5 + $0x8] sm:$0xf]
  %v295 = vld [vmem:[%s5 + $0xc] sm:$0xf]
  %v296 = vld [vmem:[%s5 + $0x10] sm:$0xf]
  %v297 = vld [vmem:[%s5 + $0x14] sm:$0xf]
  %v298 = vld [vmem:[%s5 + $0x18] sm:$0xf]
  %v299 = vld [vmem:[%s5 + $0x1c] sm:$0xf]
  %v300 = vld [vmem:[%s5 + $0x20] sm:$0xf]
  %v301 = vld [vmem:[%s5 + $0x24] sm:$0xf]
  %v302 = vld [vmem:[%s5 + $0x28] sm:$0xf]
  %v303 = vld [vmem:[%s5 + $0x2c] sm:$0xf]
  %v304 = vld [vmem:[%s5 + $0x30] sm:$0xf]
  %v305 = vld [vmem:[%s5 + $0x34] sm:$0xf]
  %v306 = vld [vmem:[%s5 + $0x38] sm:$0xf]
  %v307 = vld [vmem:[%s5 + $0x3c] sm:$0xf]
  %v308 = vld [vmem:[%s6] sm:$0x1]
  %v310 = vlaneseq
  %v311 = vshrl.u32 %v310, 7
  %v312 = vsub.s32 0, %v311
  %v313 = vrot.slane %v308, %v312
  %v331 = vunpack.c.l.b16 %v292
  %v332 = vunpack.c.l.b16 %v293
  %v333 = vunpack.c.l.b16 %v294
  %v334 = vunpack.c.l.b16 %v295
  %v335 = vunpack.c.l.b16 %v296
  %v336 = vunpack.c.l.b16 %v297
  %v337 = vunpack.c.l.b16 %v298
  %v338 = vunpack.c.l.b16 %v299
  %v339 = vunpack.c.l.b16 %v300
  %v340 = vunpack.c.l.b16 %v301
  %v341 = vunpack.c.l.b16 %v302
  %v342 = vunpack.c.l.b16 %v303
  %v343 = vunpack.c.l.b16 %v304
  %v344 = vunpack.c.l.b16 %v305
  %v345 = vunpack.c.l.b16 %v306
  %v346 = vunpack.c.l.b16 %v307
  %v347 = vpack.c.b16 %v332, %v331
  %v348 = vpack.c.b16 %v334, %v333
  %v349 = vpack.c.b16 %v336, %v335
  %v350 = vpack.c.b16 %v338, %v337
  %v351 = vpack.c.b16 %v340, %v339
  %v352 = vpack.c.b16 %v342, %v341
  %v353 = vpack.c.b16 %v344, %v343
  %v354 = vpack.c.b16 %v346, %v345
  %363 = vmatprep.subr.bf16.mxu0 0
  %364 = vmatpush1.bf16.msra.mxu0 %v354
  %365 = vmatprep.subr.bf16.mxu0 0
  %366 = vmatpush1.bf16.msra.mxu0 %v353
  %367 = vmatprep.subr.bf16.mxu0 0
  %368 = vmatpush1.bf16.msra.mxu0 %v352
  %369 = vmatprep.subr.bf16.mxu0 0
  %370 = vmatpush1.bf16.msra.mxu0 %v351
  %371 = vmatprep.subr.bf16.mxu0 0
  %372 = vmatpush1.bf16.msra.mxu0 %v350
  %373 = vmatprep.subr.bf16.mxu0 0
  %374 = vmatpush1.bf16.msra.mxu0 %v349
  %375 = vmatprep.subr.bf16.mxu0 0
  %376 = vmatpush1.bf16.msra.mxu0 %v348
  %377 = vmatprep.subr.bf16.mxu0 0
  %378 = vmatpush1.bf16.msra.mxu0 %v347
  %379 = vmatprep.subr.bf16.mxu0 0
  %380 = vmatpush2.bf16.msra.mxu0 0
  %381 = vmatprep.subr.bf16.mxu0 0
  %382 = vmatpush2.bf16.msra.mxu0 0
  %383 = vmatprep.subr.bf16.mxu0 0
  %384 = vmatpush2.bf16.msra.mxu0 0
  %385 = vmatprep.subr.bf16.mxu0 0
  %386 = vmatpush2.bf16.msra.mxu0 0
  %387 = vmatprep.subr.bf16.mxu0 0
  %388 = vmatpush2.bf16.msra.mxu0 0
  %389 = vmatprep.subr.bf16.mxu0 0
  %390 = vmatpush2.bf16.msra.mxu0 0
  %391 = vmatprep.subr.bf16.mxu0 0
  %392 = vmatpush2.bf16.msra.mxu0 0
  %393 = vmatprep.subr.bf16.mxu0 0
  %394 = vmatpush2.bf16.msra.mxu0 0
  %395 = vmatprep.mubr.bf16.mxu0 0
  %396 = vmatmul.mubr.bf16.gmra.mxu0 %v288
  %v397 = vpop.f32.mrf.mxu0
  %v398 = vadd.f32 %v313, %v397
  %v399 = vpop.f32.mrf.mxu0
  %v400 = vpop.f32.mrf.mxu0
  %v401 = vadd.f32 %v313, %v400
  %v402 = vpop.f32.mrf.mxu0
  %403 = vmatprep.mubr.bf16.mxu0 0
  %404 = vmatmul.mubr.bf16.gmra.mxu0 %v289
  %v405 = vpop.f32.mrf.mxu0
  %v406 = vadd.f32 %v313, %v405
  %v407 = vpop.f32.mrf.mxu0
  %v408 = vpop.f32.mrf.mxu0
  %v409 = vadd.f32 %v313, %v408
  %v410 = vpop.f32.mrf.mxu0
  %411 = vmatprep.mubr.bf16.mxu0 0
  %412 = vmatmul.mubr.bf16.gmra.mxu0 %v290
  %v413 = vpop.f32.mrf.mxu0
  %v414 = vadd.f32 %v313, %v413
  %v415 = vpop.f32.mrf.mxu0
  %v416 = vpop.f32.mrf.mxu0
  %v417 = vadd.f32 %v313, %v416
  %v418 = vpop.f32.mrf.mxu0
  %419 = vmatprep.mubr.bf16.mxu0 0
  %420 = vmatmul.mubr.bf16.gmra.mxu0 %v291
  %v421 = vpop.f32.mrf.mxu0
  %v422 = vadd.f32 %v313, %v421
  %v423 = vpop.f32.mrf.mxu0
  %v424 = vpop.f32.mrf.mxu0
  %v425 = vadd.f32 %v313, %v424
  %v426 = vpop.f32.mrf.mxu0
  %427 = vdwg.mxu0
  %vm428 = vcmask 64512
  %429 = vst.msk [vmem:[%s7] sm:$0xff] %vm428, %v398
  %430 = vst.msk [vmem:[%s7 + $0x8] sm:$0xff] %vm428, %v401
  %431 = vst.msk [vmem:[%s7 + $0x10] sm:$0xff] %vm428, %v406
  %432 = vst.msk [vmem:[%s7 + $0x18] sm:$0xff] %vm428, %v409
  %433 = vst.msk [vmem:[%s7 + $0x20] sm:$0xff] %vm428, %v414
  %434 = vst.msk [vmem:[%s7 + $0x28] sm:$0xff] %vm428, %v417
  %435 = vst.msk [vmem:[%s7 + $0x30] sm:$0xff] %vm428, %v422
  %436 = vst.msk [vmem:[%s7 + $0x38] sm:$0xff] %vm428, %v425
  // Predicated region
  $region30: #{rnd_forward.1} parent=0 // pred_check
    _
  $region31: #{rnd_forward.1} parent=0 // pred_check_branch
    %438 = sbr.rel (0) target = $region33
  $region32: #{rnd_forward.1} parent=0 // pred_region
    _
  $region33: #{rnd_forward.1} parent=0 // pred_fallthru
    _
  // Predicated region
  $region34: #{rnd_forward.1} parent=0 // pred_check
    _
  $region35: #{rnd_forward.1} parent=0 // pred_check_branch
    %440 = sbr.rel (0) target = $region37
  $region36: #{rnd_forward.1} parent=0 // pred_region
    _
  $region37: #{rnd_forward.1} parent=0 // pred_fallthru
    _

</llo_original>
